<compile_context>
chip_gen: v5e
topology: v5e:2x2
jax: 0.10.0
libtpu: 0.0.40
codegen_flags: <defaults>
</compile_context>

<pallas_src>
import jax
import jax.numpy as jnp
from jax.experimental import pallas as pl
from jax.experimental.pallas import tpu as pltpu

_LANE = 128
_VMEM_TILE_BUDGET = 18 * 1024 * 1024   # budget for the explicit (double-buffered) tiles
_VMEM_LIMIT_BYTES = 40 * 1024 * 1024   # > v5e's 16 MiB scoped default, < v7x's 64 MiB physical
_MAX_BLOCK_B = 4096                    # batch rows / grid step (review: 2048-4096 on v7x)


def _round_up(a, m):
    return ((a + m - 1) // m) * m


def _masked_softmax(att, mask):
    """masked_fill(mask, -1e9) + softmax over the last axis (exact division)."""
    att = jnp.where(mask != 0, jnp.float32(-1e9), att)
    att_max = jnp.max(att, axis=-1, keepdims=True)
    e = jnp.exp(att - att_max)
    denom = jnp.sum(e, axis=-1, keepdims=True)
    # Exact division: kernel is HBM-bound, the approx reciprocal bought nothing.
    return e / denom


def _self_att_wide_kernel(x_ref, mask_ref, w1b_ref, b1b_ref, w2b_ref, out_ref):
    # Lane-folded path: the sequence axis is folded into the lane dimension.
    #   x_ref:    (Bt, N*H)    lane-dense activation tile
    #   mask_ref: (Bt, N)      int32, nonzero == masked
    #   w1b_ref:  (N*H, N*H2)  block-diagonal kron(I_N, f1.weight.T)
    #   b1b_ref:  (1, N*H2)    f1.bias tiled N times
    #   w2b_ref:  (N*H2, N)    block-diagonal kron(I_N, f2.weight.T)
    #   out_ref:  (Bt, N)      softmax attention weights
    h = jnp.tanh(
        jnp.dot(x_ref[...], w1b_ref[...], preferred_element_type=jnp.float32)
        + b1b_ref[...])                                                  # (Bt, N*H2) dense
    att = jnp.dot(h, w2b_ref[...], preferred_element_type=jnp.float32)   # (Bt, N)
    out_ref[...] = _masked_softmax(att, mask_ref[...])


def _self_att_rows_kernel(x_ref, mask_ref, w1t_ref, b1_ref, w2r_ref, out_ref):
    # Generic fallback (large N*H): one MXU row per (batch, seq) element.
    #   x_ref: (Bt*N, H) (flattened in the wrapper -> no big in-kernel reshape)
    #   mask_ref: (Bt, N); w1t_ref: (H, H2); b1_ref: (1, H2); w2r_ref: (1, 1, H2)
    bt, n = mask_ref.shape
    h2 = w1t_ref.shape[1]
    h = jnp.tanh(
        jnp.dot(x_ref[...], w1t_ref[...], preferred_element_type=jnp.float32)
        + b1_ref[...])                                                   # (Bt*N, H2)
    # Leading-dim split only (layout-preserving when N % 8 == 0); f2 is a VPU
    # multiply + lane reduce (no degenerate 1-lane matmul).
    att = jnp.sum(h.reshape(bt, n, h2) * w2r_ref[...], axis=-1)          # (Bt, N)
    out_ref[...] = _masked_softmax(att, mask_ref[...])


def _choose_block_b(B, max_b):
    """Batch tile: multiple of 8, within the VMEM budget, dividing B exactly when
    possible (no pad / no extra HBM copy of x), and >=2 grid steps for large B so
    the 'parallel' grid axis can be split across v7x's two TensorCores."""
    if B <= 8:
        return 8
    min_steps = max(pl.cdiv(B, max_b), 2 if B >= 256 else 1)
    # Prefer an exact divisor of B (zero padded rows).
    for steps in range(min_steps, min(min_steps + 64, B) + 1):
        blk = B // steps
        if B % steps == 0 and blk % 8 == 0 and blk >= 8:
            return blk
    # Otherwise pad by at most ~8*steps rows (never round B up to a huge block).
    steps = min_steps
    if steps > 1 and steps % 2:
        steps += 1                      # even step counts split cleanly across 2 TCs
    return _round_up(pl.cdiv(B, steps), 8)


def self_att(x, mask, w1, b1, w2, b2, *, block_b=None,
             max_fold_weight_bytes=2 * 1024 * 1024):
    """Pallas-TPU forward of Self_att.

    x:    (B, N, H) float32 / bfloat16 GRU outputs
    mask: (B, 1, 1, N) bool, True == masked (module does mask.squeeze(1).squeeze(1))
    w1, b1: f1.weight (H//2, H), f1.bias (H//2,)
    w2, b2: f2.weight (1, H//2), f2.bias (1,)
    returns (B, N, 1) float32 attention weights.
    """
    B, N, H = x.shape
    H2 = w1.shape[0]
    assert w1.shape == (H2, H) and b1.shape == (H2,)
    assert w2.shape == (1, H2) and b2.shape == (1,)
    del b2  # scalar bias before softmax is a no-op (shift invariance)
    # TODO(synk): training-mode Dropout(0.1) (pltpu.prng_* mask) not implemented;
    # eval-mode dropout is the identity.

    mask_i = mask.reshape(B, N).astype(jnp.int32)

    # Lane-folded ("wide") path whenever the block-diagonal weight stays small:
    # removes all in-kernel reshapes and the 4-8x lane padding of (.,H)/(.,H2) tiles.
    use_wide = (N * H) * (N * H2) * 4 <= max_fold_weight_bytes

    # --- VMEM budget with *padded* lane widths (not logical sizes) ---
    itemsize = jnp.dtype(x.dtype).itemsize
    io_row = 2 * _round_up(N, _LANE) * 4                       # mask + out rows
    if use_wide:
        x_row = _round_up(N * H, _LANE) * itemsize             # lane-dense x tile row
        h_row = _round_up(N * H2, _LANE) * 4                   # f32 tanh intermediate
    else:
        x_row = N * _round_up(H, _LANE) * itemsize             # lane-padded (x4 for H=32)
        h_row = N * _round_up(H2, _LANE) * 4                   # lane-padded (x8 for H2=16)
    per_row = 2 * (x_row + io_row) + 2 * h_row                 # 2x: double-buffering / temps
    max_b = max(8, min(_MAX_BLOCK_B, (_VMEM_TILE_BUDGET // per_row) // 8 * 8))

    if block_b is None:
        block_b = _choose_block_b(B, max_b)
    else:
        block_b = max(8, _round_up(block_b, 8))

    Bp = _round_up(B, block_b)
    if Bp != B:
        x = jnp.pad(x, ((0, Bp - B), (0, 0), (0, 0)))
        mask_i = jnp.pad(mask_i, ((0, Bp - B), (0, 0)), constant_values=1)

    grid = (Bp // block_b,)
    compiler_params = pltpu.CompilerParams(
        dimension_semantics=("parallel",),       # megacore sharding on v7x
        vmem_limit_bytes=_VMEM_LIMIT_BYTES)
    out_shape = jax.ShapeDtypeStruct((Bp, N), jnp.float32)
    mask_spec = pl.BlockSpec((block_b, N), lambda i: (i, 0))
    out_spec = pl.BlockSpec((block_b, N), lambda i: (i, 0))

    if use_wide:
        NH, NH2 = N * H, N * H2
        x_wide = x.reshape(Bp, NH)                                       # free reshape in HBM
        eye = jnp.eye(N, dtype=jnp.float32)
        w1_big = jnp.kron(eye, w1.T.astype(jnp.float32)).astype(x.dtype)  # (NH, NH2)
        b1_big = jnp.tile(b1.astype(jnp.float32), N).reshape(1, NH2)
        w2_big = jnp.kron(eye, w2.T.astype(jnp.float32))                  # (NH2, N)
        out = pl.pallas_call(
            _self_att_wide_kernel,
            out_shape=out_shape,
            grid_spec=pltpu.PrefetchScalarGridSpec(
                num_scalar_prefetch=0,
                grid=grid,
                in_specs=[
                    pl.BlockSpec((block_b, NH), lambda i: (i, 0)),
                    mask_spec,
                    pl.BlockSpec((NH, NH2), lambda i: (0, 0)),
                    pl.BlockSpec((1, NH2), lambda i: (0, 0)),
                    pl.BlockSpec((NH2, N), lambda i: (0, 0)),
                ],
                out_specs=out_spec),
            compiler_params=compiler_params,
        )(x_wide, mask_i, w1_big, b1_big, w2_big)
    else:
        x_rows = x.reshape(Bp * N, H)                                    # free reshape in HBM
        w1_t = w1.T.astype(x.dtype)                                      # (H, H2)
        b1_r = b1.astype(jnp.float32).reshape(1, H2)
        w2_r = w2.astype(jnp.float32).reshape(1, 1, H2)
        out = pl.pallas_call(
            _self_att_rows_kernel,
            out_shape=out_shape,
            grid_spec=pltpu.PrefetchScalarGridSpec(
                num_scalar_prefetch=0,
                grid=grid,
                in_specs=[
                    pl.BlockSpec((block_b * N, H), lambda i: (i, 0)),
                    mask_spec,
                    pl.BlockSpec((H, H2), lambda i: (0, 0)),
                    pl.BlockSpec((1, H2), lambda i: (0, 0)),
                    pl.BlockSpec((1, 1, H2), lambda i: (0, 0, 0)),
                ],
                out_specs=out_spec),
            compiler_params=compiler_params,
        )(x_rows, mask_i, w1_t, b1_r, w2_r)

    return out[:B].reshape(B, N, 1)


def _reference(x, mask, w1, b1, w2, b2):
    """Plain-JAX reference mirroring the PyTorch forward (eval mode)."""
    B, N, H = x.shape
    m = mask.reshape(B, N)
    att = jnp.tanh(x @ w1.T + b1)                 # (B, N, H/2)
    att = att @ w2.T + b2                         # (B, N, 1)
    att = att.reshape(B, N)
    att = jnp.where(m, -1e9, att)
    att = jax.nn.softmax(att, axis=1)
    return att.reshape(B, N, 1)


if __name__ == "__main__":
    def run_case(case, B, N, H, **kw):
        H2 = H // 2
        key = jax.random.fold_in(jax.random.PRNGKey(0), case)
        kx, kw1, kb1, kw2, kb2, kl = jax.random.split(key, 6)
        x = jax.random.normal(kx, (B, N, H), dtype=jnp.float32)
        w1 = jax.random.normal(kw1, (H2, H), dtype=jnp.float32) * 0.1   # f1.weight
        b1 = jax.random.normal(kb1, (H2,), dtype=jnp.float32) * 0.1     # f1.bias
        w2 = jax.random.normal(kw2, (1, H2), dtype=jnp.float32) * 0.1   # f2.weight
        b2 = jax.random.normal(kb2, (1,), dtype=jnp.float32) * 0.1      # f2.bias
        lengths = jax.random.randint(kl, (B,), 1, N + 1)                # >=1 valid position/row
        mask = (jnp.arange(N)[None, :] >= lengths[:, None]).reshape(B, 1, 1, N)

        out = jax.block_until_ready(self_att(x, mask, w1, b1, w2, b2, **kw))
        ref = _reference(x, mask, w1, b1, w2, b2)
        assert out.shape == (B, N, 1), (case, out.shape)
        # Tolerance covers MXU default (bf16-pass) precision on f32 matmuls.
        assert jnp.allclose(out, ref, atol=1e-3, rtol=1e-3), f"case {case}: mismatch vs reference"
        # Exact division => softmax rows sum to 1 tightly (the previous failure mode).
        assert jnp.allclose(jnp.sum(out, axis=1), 1.0, atol=1e-4), f"case {case}: rows not normalized"

    # Shapes consistent with the module: GRU_hidden=32 (H2=16), seq N=8.
    run_case(0, B=2, N=8, H=32)                           # tiny batch, lane-folded path
    run_case(1, B=300, N=8, H=32)                         # multi-step grid, minimal padding
    run_case(2, B=2, N=8, H=32, max_fold_weight_bytes=0)  # generic row-tiled fallback path
    print("KERNEL_OK")
</pallas_src>

<mosaic_0001>
module attributes {stable_mosaic.version = 11 : i64} {
  func.func @_self_att_wide_kernel(%arg0: i32, %arg1: memref<8x256xf32, #tpu.memory_space<vmem>>, %arg2: memref<8x8xi32, #tpu.memory_space<vmem>>, %arg3: memref<256x128xf32, #tpu.memory_space<vmem>>, %arg4: memref<1x128xf32, #tpu.memory_space<vmem>>, %arg5: memref<128x8xf32, #tpu.memory_space<vmem>>, %arg6: memref<8x8xf32, #tpu.memory_space<vmem>>) attributes {dimension_semantics = [#tpu.dimension_semantics<parallel>], iteration_bounds = array<i64: 1>, scalar_prefetch = 0 : i64, scratch_operands = 0 : i64, tpu.core_type = #tpu.core_type<tc>, window_params = [{transform_indices = @transform_0, window_bounds = array<i64: 8, 256>}, {transform_indices = @transform_1, window_bounds = array<i64: 8, 8>}, {pipeline_mode = #tpu.pipeline_mode<synchronous>, transform_indices = @transform_2, window_bounds = array<i64: 256, 128>}, {pipeline_mode = #tpu.pipeline_mode<synchronous>, transform_indices = @transform_3, window_bounds = array<i64: 1, 128>}, {pipeline_mode = #tpu.pipeline_mode<synchronous>, transform_indices = @transform_4, window_bounds = array<i64: 128, 8>}, {transform_indices = @transform_5, window_bounds = array<i64: 8, 8>}]} {
    %c0 = arith.constant 0 : index
    %c0_0 = arith.constant 0 : index
    %0 = vector.load %arg1[%c0, %c0_0] : memref<8x256xf32, #tpu.memory_space<vmem>>, vector<8x256xf32>
    %c0_1 = arith.constant 0 : index
    %c0_2 = arith.constant 0 : index
    %1 = vector.load %arg3[%c0_1, %c0_2] : memref<256x128xf32, #tpu.memory_space<vmem>>, vector<256x128xf32>
    %cst = arith.constant dense<0.000000e+00> : vector<8x128xf32>
    %2 = tpu.matmul %0, %1, %cst {dimension_numbers = #tpu.dot_dimension_numbers<[1], [0], [0], [1], [0, 0, 1, 1], [], []>} : vector<8x256xf32>, vector<256x128xf32>, vector<8x128xf32> -> vector<8x128xf32>
    %c0_3 = arith.constant 0 : index
    %c0_4 = arith.constant 0 : index
    %3 = vector.load %arg4[%c0_3, %c0_4] : memref<1x128xf32, #tpu.memory_space<vmem>>, vector<1x128xf32>
    %4 = vector.broadcast %3 : vector<1x128xf32> to vector<8x128xf32>
    %5 = arith.addf %2, %4 : vector<8x128xf32>
    %6 = math.tanh %5 : vector<8x128xf32>
    %c0_5 = arith.constant 0 : index
    %c0_6 = arith.constant 0 : index
    %7 = vector.load %arg5[%c0_5, %c0_6] : memref<128x8xf32, #tpu.memory_space<vmem>>, vector<128x8xf32>
    %cst_7 = arith.constant dense<0.000000e+00> : vector<8x8xf32>
    %8 = tpu.matmul %6, %7, %cst_7 {dimension_numbers = #tpu.dot_dimension_numbers<[1], [0], [0], [1], [0, 0, 1, 1], [], []>} : vector<8x128xf32>, vector<128x8xf32>, vector<8x8xf32> -> vector<8x8xf32>
    %c0_8 = arith.constant 0 : index
    %c0_9 = arith.constant 0 : index
    %9 = vector.load %arg2[%c0_8, %c0_9] : memref<8x8xi32, #tpu.memory_space<vmem>>, vector<8x8xi32>
    %c0_i32 = arith.constant 0 : i32
    %10 = vector.broadcast %c0_i32 : i32 to vector<8x8xi32>
    %11 = arith.cmpi ne, %9, %10 : vector<8x8xi32>
    %cst_10 = arith.constant -1.000000e+09 : f32
    %12 = vector.broadcast %cst_10 : f32 to vector<8x8xf32>
    %13 = arith.select %11, %12, %8 : vector<8x8xi1>, vector<8x8xf32>
    %cst_11 = arith.constant dense<0xFF800000> : vector<8xf32>
    %14 = vector.multi_reduction <maximumf>, %13, %cst_11 [1] : vector<8x8xf32> to vector<8xf32>
    %15 = vector.shape_cast %14 : vector<8xf32> to vector<8x1xf32>
    %16 = vector.broadcast %15 : vector<8x1xf32> to vector<8x8xf32>
    %17 = arith.subf %13, %16 : vector<8x8xf32>
    %18 = math.exp %17 : vector<8x8xf32>
    %cst_12 = arith.constant dense<0.000000e+00> : vector<8xf32>
    %19 = vector.multi_reduction <add>, %18, %cst_12 [1] : vector<8x8xf32> to vector<8xf32>
    %20 = vector.shape_cast %19 : vector<8xf32> to vector<8x1xf32>
    %21 = vector.broadcast %20 : vector<8x1xf32> to vector<8x8xf32>
    %22 = arith.divf %18, %21 : vector<8x8xf32>
    %c0_13 = arith.constant 0 : index
    %c0_14 = arith.constant 0 : index
    %23 = vector.load %arg6[%c0_13, %c0_14] : memref<8x8xf32, #tpu.memory_space<vmem>>, vector<8x8xf32>
    tpu.vector_store %arg6[%c0_13, %c0_14], %22 {strides = array<i32>} : memref<8x8xf32, #tpu.memory_space<vmem>>, vector<8x8xf32>,
    return
  }
  func.func @transform_0(%arg0: i32) -> (i32, i32) {
    %c0_i32 = arith.constant 0 : i32
    %c0_i32_0 = arith.constant 0 : i32
    return %arg0, %c0_i32 : i32, i32
  }
  func.func @transform_1(%arg0: i32) -> (i32, i32) {
    %c0_i32 = arith.constant 0 : i32
    %c0_i32_0 = arith.constant 0 : i32
    return %arg0, %c0_i32 : i32, i32
  }
  func.func @transform_2(%arg0: i32) -> (i32, i32) {
    %c0_i32 = arith.constant 0 : i32
    %c0_i32_0 = arith.constant 0 : i32
    %c0_i32_1 = arith.constant 0 : i32
    return %c0_i32, %c0_i32_0 : i32, i32
  }
  func.func @transform_3(%arg0: i32) -> (i32, i32) {
    %c0_i32 = arith.constant 0 : i32
    %c0_i32_0 = arith.constant 0 : i32
    %c0_i32_1 = arith.constant 0 : i32
    return %c0_i32, %c0_i32_0 : i32, i32
  }
  func.func @transform_4(%arg0: i32) -> (i32, i32) {
    %c0_i32 = arith.constant 0 : i32
    %c0_i32_0 = arith.constant 0 : i32
    %c0_i32_1 = arith.constant 0 : i32
    return %c0_i32, %c0_i32_0 : i32, i32
  }
  func.func @transform_5(%arg0: i32) -> (i32, i32) {
    %c0_i32 = arith.constant 0 : i32
    %c0_i32_0 = arith.constant 0 : i32
    return %arg0, %c0_i32 : i32, i32
  }
}

</mosaic_0001>

<llo_original>
// kernel: tpu_custom_call.1
$region0: #{tpu_custom_call.1}
  #allocation0 [shape = 'u32[]', space=smem, size = 0x4, offset = 0x4, fixed_abs, tag = 'smem constant byte address 0x4 - core index']
  #allocation1 [shape = 'u32[72,128]{1,0:T(1,128)}', space=vmem, size = 0x9000, scoped, tag = 'internal scratch']
  %s0 = inlined_call_operand.vmem [shape: f32[8,256], index: 0, kind: input, shape index: {}]
  %s1 = inlined_call_operand.vmem [shape: s32[8,8], index: 1, kind: input, shape index: {}]
  %s2 = inlined_call_operand.hbm [shape: f32[256,128], index: 2, kind: input, shape index: {}]
  %s3 = inlined_call_operand.vmem [shape: f32[1,128], index: 3, kind: input, shape index: {}]
  %s4 = inlined_call_operand.vmem [shape: f32[128,8], index: 4, kind: input, shape index: {}]
  %s5 = inlined_call_operand.hbm [shape: f32[8,8], index: 5, kind: output, shape index: {}]
  %s6 = sld [smem:[#allocation0]]
  $region34: #{tpu_custom_call.1} parent=0
    _
  %s8 = ssub.s32 1, %s6
  %s9 = scalar_select 0, %s8, %s6
  $region1: #{tpu_custom_call.1} parent=0
    #allocation2 [shape = 'u8[131072]{0}', space=vmem, size = 0x20000, scoped, tag = 'input window, operand 2, single buffered']
    #allocation3 [shape = 's32[1]{0}', space=sflag, size = 0x4, scoped, tag = 'scoped memory for tpu_custom_call.1']
    #allocation4 [shape = 's32[1]{0}', space=sflag, size = 0x4, scoped, tag = 'scoped memory for tpu_custom_call.1']
    #allocation5 [shape = 'u8[4096]{0}', space=vmem, size = 0x1000, scoped, tag = 'output window, operand 0, single buffered']
    %10 = vsyncpa [#allocation3], 0
    %11 = vsyncpa [#allocation4], 0
    // Predicated region
    $region2: #{tpu_custom_call.1} parent=1 // pred_check
      _
    $region3: #{tpu_custom_call.1} parent=1 // pred_check_branch
      %13 = sbr.rel (0) target = $region5
    $region4: #{tpu_custom_call.1} parent=1 // pred_region
      _
    $region5: #{tpu_custom_call.1} parent=1 // pred_fallthru
      _
    // Predicated region
    $region6: #{tpu_custom_call.1} parent=1 // pred_check
      _
    $region7: #{tpu_custom_call.1} parent=1 // pred_check_branch
      %15 = sbr.rel (0) target = $region9
    $region8: #{tpu_custom_call.1} parent=1 // pred_region
      _
    $region9: #{tpu_custom_call.1} parent=1 // pred_fallthru
      _
    // Predicated region
    $region10: #{tpu_custom_call.1} parent=1 // pred_check
      _
    $region11: #{tpu_custom_call.1} parent=1 // pred_check_branch
      %17 = sbr.rel (0) target = $region13
    $region12: #{tpu_custom_call.1} parent=1 // pred_region
      %19 = vsyncadd [#allocation3], 0
      %s20 = sshll.u32 %s2, 4
      %s21 = int_to_ptr.hbm [resolvable:$true] %s20
      %s22 = sshll.u32 [#allocation2], 4
      %s23 = int_to_ptr.vmem [resolvable:$true] %s22
      %28 = dma.hbm_to_vmem [thread:$0]  %s21, 4096, %s23, [#allocation3], 128, 128, 8
    $region13: #{tpu_custom_call.1} parent=1 // pred_fallthru
      _
    // Predicated region
    $region14: #{tpu_custom_call.1} parent=1 // pred_check
      _
    $region15: #{tpu_custom_call.1} parent=1 // pred_check_branch
      %30 = sbr.rel (0) target = $region17
    $region16: #{tpu_custom_call.1} parent=1 // pred_region
      _
    $region17: #{tpu_custom_call.1} parent=1 // pred_fallthru
      _
    // Predicated region
    $region18: #{tpu_custom_call.1} parent=1 // pred_check
      _
    $region19: #{tpu_custom_call.1} parent=1 // pred_check_branch
      %32 = sbr.rel (0) target = $region21
    $region20: #{tpu_custom_call.1} parent=1 // pred_region
      _
    $region21: #{tpu_custom_call.1} parent=1 // pred_fallthru
      _
    // Predicated region
    $region22: #{tpu_custom_call.1} parent=1 // pred_check
      _
    $region23: #{tpu_custom_call.1} parent=1 // pred_check_branch
      %34 = sbr.rel (0) target = $region25
    $region24: #{tpu_custom_call.1} parent=1 // pred_region
      %36 = dma.done [#allocation3], 4096
    $region25: #{tpu_custom_call.1} parent=1 // pred_fallthru
      _
    %v37 = vld [vmem:[%s0] sm:$0xff]
    %v38 = vld [vmem:[%s0 + $0x8] sm:$0xff]
    %v39 = vld [vmem:[#allocation2] sm:$0xff]
    %v40 = vld [vmem:[#allocation2 + $0x8] sm:$0xff]
    %v41 = vld [vmem:[#allocation2 + $0x10] sm:$0xff]
    %v42 = vld [vmem:[#allocation2 + $0x18] sm:$0xff]
    %v43 = vld [vmem:[#allocation2 + $0x20] sm:$0xff]
    %v44 = vld [vmem:[#allocation2 + $0x28] sm:$0xff]
    %v45 = vld [vmem:[#allocation2 + $0x30] sm:$0xff]
    %v46 = vld [vmem:[#allocation2 + $0x38] sm:$0xff]
    %v47 = vld [vmem:[#allocation2 + $0x40] sm:$0xff]
    %v48 = vld [vmem:[#allocation2 + $0x48] sm:$0xff]
    %v49 = vld [vmem:[#allocation2 + $0x50] sm:$0xff]
    %v50 = vld [vmem:[#allocation2 + $0x58] sm:$0xff]
    %v51 = vld [vmem:[#allocation2 + $0x60] sm:$0xff]
    %v52 = vld [vmem:[#allocation2 + $0x68] sm:$0xff]
    %v53 = vld [vmem:[#allocation2 + $0x70] sm:$0xff]
    %v54 = vld [vmem:[#allocation2 + $0x78] sm:$0xff]
    %v55 = vld [vmem:[#allocation2 + $0x80] sm:$0xff]
    %v56 = vld [vmem:[#allocation2 + $0x88] sm:$0xff]
    %v57 = vld [vmem:[#allocation2 + $0x90] sm:$0xff]
    %v58 = vld [vmem:[#allocation2 + $0x98] sm:$0xff]
    %v59 = vld [vmem:[#allocation2 + $0xa0] sm:$0xff]
    %v60 = vld [vmem:[#allocation2 + $0xa8] sm:$0xff]
    %v61 = vld [vmem:[#allocation2 + $0xb0] sm:$0xff]
    %v62 = vld [vmem:[#allocation2 + $0xb8] sm:$0xff]
    %v63 = vld [vmem:[#allocation2 + $0xc0] sm:$0xff]
    %v64 = vld [vmem:[#allocation2 + $0xc8] sm:$0xff]
    %v65 = vld [vmem:[#allocation2 + $0xd0] sm:$0xff]
    %v66 = vld [vmem:[#allocation2 + $0xd8] sm:$0xff]
    %v67 = vld [vmem:[#allocation2 + $0xe0] sm:$0xff]
    %v68 = vld [vmem:[#allocation2 + $0xe8] sm:$0xff]
    %v69 = vld [vmem:[#allocation2 + $0xf0] sm:$0xff]
    %v70 = vld [vmem:[#allocation2 + $0xf8] sm:$0xff]
    %v71 = vld [vmem:[%s3] sm:$0x1]
    %v73 = vperm.slane %v71, 0
    %75 = vmatpush.msra.mxu0 %v54
    %76 = vmatpush.msra.mxu0 %v53
    %77 = vmatpush.msra.mxu0 %v52
    %78 = vmatpush.msra.mxu0 %v51
    %79 = vmatpush.msra.mxu0 %v50
    %80 = vmatpush.msra.mxu0 %v49
    %81 = vmatpush.msra.mxu0 %v48
    %82 = vmatpush.msra.mxu0 %v47
    %83 = vmatpush.msra.mxu0 %v46
    %84 = vmatpush.msra.mxu0 %v45
    %85 = vmatpush.msra.mxu0 %v44
    %86 = vmatpush.msra.mxu0 %v43
    %87 = vmatpush.msra.mxu0 %v42
    %88 = vmatpush.msra.mxu0 %v41
    %89 = vmatpush.msra.mxu0 %v40
    %90 = vmatpush.msra.mxu0 %v39
    %91 = vmatmul.f32.gmra.mxu0 %v37
    %v92 = vpop.f32.mrf.mxu0
    %v93 = vadd.f32 %v73, %v92
    %94 = vdwg.mxu0
    %95 = vmatpush.msra.mxu0 %v70
    %96 = vmatpush.msra.mxu0 %v69
    %97 = vmatpush.msra.mxu0 %v68
    %98 = vmatpush.msra.mxu0 %v67
    %99 = vmatpush.msra.mxu0 %v66
    %100 = vmatpush.msra.mxu0 %v65
    %101 = vmatpush.msra.mxu0 %v64
    %102 = vmatpush.msra.mxu0 %v63
    %103 = vmatpush.msra.mxu0 %v62
    %104 = vmatpush.msra.mxu0 %v61
    %105 = vmatpush.msra.mxu0 %v60
    %106 = vmatpush.msra.mxu0 %v59
    %107 = vmatpush.msra.mxu0 %v58
    %108 = vmatpush.msra.mxu0 %v57
    %109 = vmatpush.msra.mxu0 %v56
    %110 = vmatpush.msra.mxu0 %v55
    %111 = vmatmul.f32.gmra.mxu0 %v38
    %v112 = vpop.f32.mrf.mxu0
    %v113 = vadd.f32 %v93, %v112
    %114 = vdwg.mxu0
    %v115 = vtanh.pop %v113
    %v116 = vld [vmem:[%s4] sm:$0xff]
    %v117 = vld [vmem:[%s4 + $0x8] sm:$0xff]
    %v118 = vld [vmem:[%s4 + $0x10] sm:$0xff]
    %v119 = vld [vmem:[%s4 + $0x18] sm:$0xff]
    %v120 = vld [vmem:[%s4 + $0x20] sm:$0xff]
    %v121 = vld [vmem:[%s4 + $0x28] sm:$0xff]
    %v122 = vld [vmem:[%s4 + $0x30] sm:$0xff]
    %v123 = vld [vmem:[%s4 + $0x38] sm:$0xff]
    %v124 = vld [vmem:[%s4 + $0x40] sm:$0xff]
    %v125 = vld [vmem:[%s4 + $0x48] sm:$0xff]
    %v126 = vld [vmem:[%s4 + $0x50] sm:$0xff]
    %v127 = vld [vmem:[%s4 + $0x58] sm:$0xff]
    %v128 = vld [vmem:[%s4 + $0x60] sm:$0xff]
    %v129 = vld [vmem:[%s4 + $0x68] sm:$0xff]
    %v130 = vld [vmem:[%s4 + $0x70] sm:$0xff]
    %v131 = vld [vmem:[%s4 + $0x78] sm:$0xff]
    %132 = vmatpush.msra.mxu0 %v131
    %133 = vmatpush.msra.mxu0 %v130
    %134 = vmatpush.msra.mxu0 %v129
    %135 = vmatpush.msra.mxu0 %v128
    %136 = vmatpush.msra.mxu0 %v127
    %137 = vmatpush.msra.mxu0 %v126
    %138 = vmatpush.msra.mxu0 %v125
    %139 = vmatpush.msra.mxu0 %v124
    %140 = vmatpush.msra.mxu0 %v123
    %141 = vmatpush.msra.mxu0 %v122
    %142 = vmatpush.msra.mxu0 %v121
    %143 = vmatpush.msra.mxu0 %v120
    %144 = vmatpush.msra.mxu0 %v119
    %145 = vmatpush.msra.mxu0 %v118
    %146 = vmatpush.msra.mxu0 %v117
    %147 = vmatpush.msra.mxu0 %v116
    %148 = vmatmul.f32.gmra.mxu0 %v115
    %v149 = vpop.f32.mrf.mxu0
    %v150 = vadd.f32 0.0, %v149
    %151 = vdwg.mxu0
    %v152 = vld [vmem:[%s1] sm:$0xff]
    %vm153 = vcmp.ne.s32.totalorder %v152, 0
    %v154 = vsel %vm153, -1e+09, %v150
    %vm155 = vcmask 64512
    %v156 = vsel %vm155, %v154, -inf
    %157 = vmax.xlane.f32.xlu0 %v156
    %v158 = vpop.xlane.xlu0 %157
    %v159 = vsub.f32 %v154, %v158
    %v160 = vmul.f32 %v159, 1.442695
    %v161 = vpow.pop %v160
    %v162 = vsel %vm155, %v161, 0.0
    %163 = vadd.xlane.f32.xlu0 %v162
    %v164 = vpop.xlane.xlu0 %163
    %v165 = vrcp.pop %v164
    %v166 = vmul.f32 %v164, %v165
    %v167 = vsub.f32 1.0, %v166
    %v168 = vmul.f32 %v165, %v167
    %v169 = vadd.f32 %v165, %v168
    %vm170 = vweird.f32 %v164
    %vm171 = vweird.f32 %v165
    %vm172 = vmor %vm170, %vm171
    %v173 = vsel %vm172, %v165, %v169
    %v174 = vand.u32 2147483647, %v164
    %vm175 = vcmp.eq.f32.partialorder %v174, 8.507059e+37
    %v176 = vand.u32 %v164, 2147483648
    %v177 = vor.u32 1.1754944e-38, %v176
    %v178 = vsel %vm175, %v177, %v173
    %v179 = vmul.f32 %v161, %v178
    %180 = vst.msk [vmem:[#allocation5] sm:$0xff] %vm155, %v179
    // Predicated region
    $region26: #{tpu_custom_call.1} parent=1 // pred_check
      _
    $region27: #{tpu_custom_call.1} parent=1 // pred_check_branch
      %182 = sbr.rel (0) target = $region29
    $region28: #{tpu_custom_call.1} parent=1 // pred_region
      %184 = vsyncadd [#allocation4], 0
      %s186 = sshll.u32 [#allocation5], 4
      %s187 = int_to_ptr.vmem [resolvable:$true] %s186
      %s188 = sshll.u32 %s5, 4
      %s189 = int_to_ptr.hbm [resolvable:$true] %s188
      %191 = dma.vmem_to_hbm [thread:$0]  %s187, 128, %s189, [#allocation4]
    $region29: #{tpu_custom_call.1} parent=1 // pred_fallthru
      _
    // Predicated region
    $region30: #{tpu_custom_call.1} parent=1 // pred_check
      _
    $region31: #{tpu_custom_call.1} parent=1 // pred_check_branch
      %193 = sbr.rel (0) target = $region33
    $region32: #{tpu_custom_call.1} parent=1 // pred_region
      %195 = dma.done [#allocation4], 128
    $region33: #{tpu_custom_call.1} parent=1 // pred_fallthru
      _
    %196 = vsyncpa [#allocation3], 1
    %197 = vsyncpa [#allocation4], 1

</llo_original>
